<compile_context>
chip_gen: v5e
topology: v5e:2x2
jax: 0.10.0
libtpu: 0.0.40
codegen_flags: <defaults>
</compile_context>

<pallas_src>
import jax
import jax.numpy as jnp
import numpy as np
from jax.experimental import pallas as pl
from jax.experimental.pallas import tpu as pltpu


def _unpool_kernel(i1_ref, i2_ref, x_ref, out_ref):
    """One (T, Ft) output row-chunk for one (batch, feature-tile) pair.

    i1_ref, i2_ref : (T, 1) int32 source-vertex ids per output row
                     (identity rows carry their own row id, new-vertex rows the
                      pooled pair, so out[r] = 0.5*(x[i1[r]] + x[i2[r]]) covers
                      both the copied x rows and the averaged new rows).
    x_ref          : (V, Ft) vertex-feature table (resident across row chunks)
    out_ref        : (T, Ft) output chunk
    """
    V = x_ref.shape[0]
    T = out_ref.shape[0]
    base = pl.program_id(2) * T          # first output row of this chunk

    def _gather_block():
        xv = x_ref[...]                                          # (V, Ft)
        idx1 = i1_ref[...]                                       # (T, 1)
        idx2 = i2_ref[...]                                       # (T, 1)
        col = jax.lax.broadcasted_iota(jnp.int32, (T, V), 1)
        # One-hot gather matrix: row r has 0.5 at i1[r] and 0.5 at i2[r]
        # (adds to 1.0 at r for identity rows where i1 == i2 == r).
        w = ((col == idx1).astype(xv.dtype) +
             (col == idx2).astype(xv.dtype)) * 0.5
        out_ref[...] = jnp.dot(
            w, xv,
            preferred_element_type=jnp.float32,
            precision=jax.lax.Precision.HIGHEST,
        ).astype(out_ref.dtype)

    if T <= V:
        # Chunk fully inside the identity region: bulk lane-dense copy, no MXU.
        @pl.when(base + T <= V)
        def _():
            start = pl.multiple_of(base, 8)
            out_ref[...] = x_ref[pl.ds(start, T), :]

        # Boundary + new-vertex chunks: vectorized one-hot gather on the MXU.
        @pl.when(base + T > V)
        def _():
            _gather_block()
    else:
        _gather_block()


def graph_unpooling(x, pool_idx, *, chunk_rows=None):
    """x: (B, V, F) float array, pool_idx: (E, 2) int array of vertex ids."""
    B, V, F = x.shape
    E = int(pool_idx.shape[0])
    if E == 0:
        return x

    itemsize = jnp.dtype(x.dtype).itemsize

    # Output row-chunk size T: multiple of 8; <= V when possible so pure
    # identity chunks take the cheap bulk-copy path; 256 amortizes the
    # per-grid-step overhead on real mesh sizes.
    if chunk_rows is not None:
        T = max(8, (int(chunk_rows) // 8) * 8)
    elif V >= 256:
        T = 256
    else:
        T = max(8, (V // 8) * 8)

    R = V + E                       # real number of output rows
    G = pl.cdiv(R, T)               # row-chunk grid; last chunk may be partial
    R_pad = G * T
    pad_e = R_pad - R

    # Feature tiling (v7x VMEM bound): keep the double-buffered (V, f_tile)
    # slab small.  Only tile when F is a multiple of 128 so tiles stay
    # lane-dense; otherwise use the full (lane-complete) feature dim.
    f_tile = F
    if F % 128 == 0 and V * F * itemsize > (8 << 20):
        groups = F // 128
        max_groups = max(1, (8 << 20) // (V * 128 * itemsize))
        gsel = min(groups, max_groups)
        while groups % gsel:
            gsel -= 1
        f_tile = 128 * gsel
    GF = F // f_tile

    # Per-output-row source indices (identity for rows < V, pooled pair after).
    # NOTE: indices are clamped to [0, V-1]; PyTorch's gather would raise on
    # out-of-range ids.  Padded rows (>= R) map to vertex 0 and are dropped by
    # the masked writeback of the final partial block.
    idx = jnp.clip(pool_idx.astype(jnp.int32), 0, V - 1)
    ident = jnp.arange(V, dtype=jnp.int32)
    idx1 = jnp.concatenate([ident, jnp.pad(idx[:, 0], (0, pad_e))]).reshape(R_pad, 1)
    idx2 = jnp.concatenate([ident, jnp.pad(idx[:, 1], (0, pad_e))]).reshape(R_pad, 1)

    grid = (B, GF, G)
    in_specs = [
        pl.BlockSpec((T, 1), lambda b, fi, g: (g, 0)),                 # idx1
        pl.BlockSpec((T, 1), lambda b, fi, g: (g, 0)),                 # idx2
        pl.BlockSpec((None, V, f_tile), lambda b, fi, g: (b, 0, fi)),  # x table
    ]
    out_specs = pl.BlockSpec((None, T, f_tile), lambda b, fi, g: (b, g, fi))

    cost = pl.CostEstimate(
        flops=2 * B * R_pad * V * F,
        transcendentals=0,
        bytes_accessed=(B * V * F + B * R * F) * itemsize + B * GF * R_pad * 8,
    )

    return pl.pallas_call(
        _unpool_kernel,
        grid=grid,
        in_specs=in_specs,
        out_specs=out_specs,
        out_shape=jax.ShapeDtypeStruct((B, R, F), x.dtype),
        compiler_params=pltpu.CompilerParams(
            dimension_semantics=("parallel", "parallel", "parallel")),
        cost_estimate=cost,
    )(idx1, idx2, x)


if __name__ == "__main__":
    key = jax.random.PRNGKey(0)
    B, V, F, E = 2, 16, 32, 8

    k_x, k_i1, k_i2 = jax.random.split(key, 3)
    x = jax.random.normal(k_x, (B, V, F), dtype=jnp.float32)
    # deterministic "pool_idx_array" (module __init__ argument): (E, 2) vertex ids
    pool_idx = jnp.stack(
        [jax.random.randint(k_i1, (E,), 0, V, dtype=jnp.int32),
         jax.random.randint(k_i2, (E,), 0, V, dtype=jnp.int32)],
        axis=1,
    )

    fn = jax.jit(graph_unpooling)
    out = jax.block_until_ready(fn(x, pool_idx))

    # Pure-JAX reference (mirrors the PyTorch forward exactly).
    x1 = x[:, pool_idx[:, 0], :]
    x2 = x[:, pool_idx[:, 1], :]
    ref = jnp.concatenate([x, 0.5 * (x1 + x2)], axis=1)

    assert out.shape == (B, V + E, F), out.shape
    np.testing.assert_allclose(np.asarray(out), np.asarray(ref), rtol=1e-6, atol=1e-6)
    print("KERNEL_OK")
</pallas_src>

<mosaic_0001>
module attributes {stable_mosaic.version = 11 : i64} {
  func.func @_unpool_kernel(%arg0: i32, %arg1: i32, %arg2: i32, %arg3: memref<16x1xi32, #tpu.memory_space<vmem>>, %arg4: memref<16x1xi32, #tpu.memory_space<vmem>>, %arg5: memref<1x16x32xf32, #tpu.memory_space<vmem>>, %arg6: memref<1x16x32xf32, #tpu.memory_space<vmem>>) attributes {dimension_semantics = [#tpu.dimension_semantics<parallel>, #tpu.dimension_semantics<parallel>, #tpu.dimension_semantics<parallel>], iteration_bounds = array<i64: 2, 1, 2>, scalar_prefetch = 0 : i64, scratch_operands = 0 : i64, tpu.core_type = #tpu.core_type<tc>, window_params = [{transform_indices = @transform_0, window_bounds = array<i64: 16, 1>}, {transform_indices = @transform_1, window_bounds = array<i64: 16, 1>}, {transform_indices = @transform_2, window_bounds = array<i64: 1, 16, 32>}, {transform_indices = @transform_3, window_bounds = array<i64: 1, 16, 32>}]} {
    %c16_i32 = arith.constant 16 : i32
    %0 = arith.muli %arg2, %c16_i32 : i32
    %c16_i32_0 = arith.constant 16 : i32
    %1 = arith.addi %0, %c16_i32_0 : i32
    %c16_i32_1 = arith.constant 16 : i32
    %2 = arith.cmpi sle, %1, %c16_i32_1 : i32
    %3 = arith.extui %2 : i1 to i32
    %c0_i32 = arith.constant 0 : i32
    %4 = arith.cmpi ne, %3, %c0_i32 : i32
    scf.if %4 {
      %9 = tpu.assume_multiple %0, 8 : i32
      %c0 = arith.constant 0 : index
      %10 = arith.index_cast %9 : i32 to index
      %c0_5 = arith.constant 0 : index
      %11 = vector.load %arg5[%c0, %10, %c0_5] : memref<1x16x32xf32, #tpu.memory_space<vmem>>, vector<1x16x32xf32>
      %12 = vector.shape_cast %11 : vector<1x16x32xf32> to vector<16x32xf32>
      %c0_6 = arith.constant 0 : index
      %c0_7 = arith.constant 0 : index
      %c0_8 = arith.constant 0 : index
      %13 = vector.load %arg6[%c0_6, %c0_7, %c0_8] : memref<1x16x32xf32, #tpu.memory_space<vmem>>, vector<1x16x32xf32>
      %14 = vector.shape_cast %13 : vector<1x16x32xf32> to vector<16x32xf32>
      %15 = vector.shape_cast %12 : vector<16x32xf32> to vector<1x16x32xf32>
      tpu.vector_store %arg6[%c0_6, %c0_7, %c0_8], %15 {strides = array<i32>} : memref<1x16x32xf32, #tpu.memory_space<vmem>>, vector<1x16x32xf32>,
    } else {
    }
    %c16_i32_2 = arith.constant 16 : i32
    %5 = arith.addi %0, %c16_i32_2 : i32
    %c16_i32_3 = arith.constant 16 : i32
    %6 = arith.cmpi sgt, %5, %c16_i32_3 : i32
    %7 = arith.extui %6 : i1 to i32
    %c0_i32_4 = arith.constant 0 : i32
    %8 = arith.cmpi ne, %7, %c0_i32_4 : i32
    scf.if %8 {
      %c0 = arith.constant 0 : index
      %c0_5 = arith.constant 0 : index
      %c0_6 = arith.constant 0 : index
      %9 = vector.load %arg5[%c0, %c0_5, %c0_6] : memref<1x16x32xf32, #tpu.memory_space<vmem>>, vector<1x16x32xf32>
      %10 = vector.shape_cast %9 : vector<1x16x32xf32> to vector<16x32xf32>
      %c0_7 = arith.constant 0 : index
      %c0_8 = arith.constant 0 : index
      %11 = vector.load %arg3[%c0_7, %c0_8] : memref<16x1xi32, #tpu.memory_space<vmem>>, vector<16x1xi32>
      %c0_9 = arith.constant 0 : index
      %c0_10 = arith.constant 0 : index
      %12 = vector.load %arg4[%c0_9, %c0_10] : memref<16x1xi32, #tpu.memory_space<vmem>>, vector<16x1xi32>
      %13 = tpu.iota {dimensions = array<i32: 1>} : vector<16x16xi32>
      %14 = vector.broadcast %11 : vector<16x1xi32> to vector<16x16xi32>
      %15 = arith.cmpi eq, %13, %14 : vector<16x16xi32>
      %16 = arith.extui %15 : vector<16x16xi1> to vector<16x16xi32>
      %17 = arith.sitofp %16 : vector<16x16xi32> to vector<16x16xf32>
      %18 = vector.broadcast %12 : vector<16x1xi32> to vector<16x16xi32>
      %19 = arith.cmpi eq, %13, %18 : vector<16x16xi32>
      %20 = arith.extui %19 : vector<16x16xi1> to vector<16x16xi32>
      %21 = arith.sitofp %20 : vector<16x16xi32> to vector<16x16xf32>
      %22 = arith.addf %17, %21 : vector<16x16xf32>
      %cst = arith.constant 5.000000e-01 : f32
      %23 = vector.broadcast %cst : f32 to vector<16x16xf32>
      %24 = arith.mulf %22, %23 : vector<16x16xf32>
      %cst_11 = arith.constant dense<0.000000e+00> : vector<16x32xf32>
      %25 = tpu.matmul %24, %10, %cst_11 {dimension_numbers = #tpu.dot_dimension_numbers<[1], [0], [0], [1], [0, 0, 1, 1], [], []>, precision = #tpu.contract_precision<fp32>} : vector<16x16xf32>, vector<16x32xf32>, vector<16x32xf32> -> vector<16x32xf32>
      %c0_12 = arith.constant 0 : index
      %c0_13 = arith.constant 0 : index
      %c0_14 = arith.constant 0 : index
      %26 = vector.load %arg6[%c0_12, %c0_13, %c0_14] : memref<1x16x32xf32, #tpu.memory_space<vmem>>, vector<1x16x32xf32>
      %27 = vector.shape_cast %26 : vector<1x16x32xf32> to vector<16x32xf32>
      %28 = vector.shape_cast %25 : vector<16x32xf32> to vector<1x16x32xf32>
      tpu.vector_store %arg6[%c0_12, %c0_13, %c0_14], %28 {strides = array<i32>} : memref<1x16x32xf32, #tpu.memory_space<vmem>>, vector<1x16x32xf32>,
    } else {
    }
    return
  }
  func.func @transform_0(%arg0: i32, %arg1: i32, %arg2: i32) -> (i32, i32) {
    %c0_i32 = arith.constant 0 : i32
    %c0_i32_0 = arith.constant 0 : i32
    return %arg2, %c0_i32 : i32, i32
  }
  func.func @transform_1(%arg0: i32, %arg1: i32, %arg2: i32) -> (i32, i32) {
    %c0_i32 = arith.constant 0 : i32
    %c0_i32_0 = arith.constant 0 : i32
    return %arg2, %c0_i32 : i32, i32
  }
  func.func @transform_2(%arg0: i32, %arg1: i32, %arg2: i32) -> (i32, i32, i32) {
    %c0_i32 = arith.constant 0 : i32
    %c0_i32_0 = arith.constant 0 : i32
    return %arg0, %c0_i32, %arg1 : i32, i32, i32
  }
  func.func @transform_3(%arg0: i32, %arg1: i32, %arg2: i32) -> (i32, i32, i32) {
    %c0_i32 = arith.constant 0 : i32
    return %arg0, %arg2, %arg1 : i32, i32, i32
  }
}

</mosaic_0001>

<llo_original>
// kernel: graph_unpooling.1
$region0: #{graph_unpooling.1}
  #allocation0 [shape = 'u32[]', space=smem, size = 0x4, offset = 0x4, fixed_abs, tag = 'smem constant byte address 0x4 - core index']
  #allocation1 [shape = 'u32[72,128]{1,0:T(1,128)}', space=vmem, size = 0x9000, scoped, tag = 'internal scratch']
  %s0 = inlined_call_operand.vmem [shape: s32[32,1], index: 0, kind: input, shape index: {}]
  %s1 = inlined_call_operand.vmem [shape: s32[32,1], index: 1, kind: input, shape index: {}]
  %s2 = inlined_call_operand.vmem [shape: f32[2,16,32], index: 2, kind: input, shape index: {}]
  %s3 = inlined_call_operand.hbm [shape: f32[2,24,32], index: 3, kind: output, shape index: {}]
  %s4 = sld [smem:[#allocation0]]
  $region53: #{graph_unpooling.1} parent=0
    _
  %s6 = ssub.s32 1, %s4
  %s7 = scalar_select 0, %s6, %s4
  $region1: #{graph_unpooling.1} parent=0
    #allocation2 [shape = 'u8[16384]{0}', space=vmem, size = 0x4000, scoped, tag = 'output window, operand 0']
    #allocation3 [shape = 's32[2]{0}', space=sflag, size = 0x8, scoped, tag = 'scoped memory for graph_unpooling.1']
    %8 = vsyncpa [#allocation3], 0
    %s9 = scalar_lea.sflag [#allocation3], 1
    %10 = vsyncpa %s9, 0
    loop: start=0, step=1, limit=6
    $region2: #{graph_unpooling.1} parent=1 // loop_pre_header
      _
    $region3: #{graph_unpooling.1} parent=1 // loop_header
      %s12 = sphi 0, %s16
      %p13 = scmp.ge.s32.totalorder %s12, 6
      %s19 = sphi 0, %s38
      %s20 = sphi 0, %s34
      %s21 = sphi 0, %s30
      %s22 = sphi 0, %s19
      %s23 = sphi 0, %s20
      %s24 = sphi 0, %s21
      %s25 = sphi 0, %s22
      %s26 = sphi 0, %s23
      %s27 = sphi 0, %s24
      %s41 = sphi 0, %s43
      %s44 = sphi 0, %s41
      %s45 = sphi 0, %s44
      %s61 = sphi 0, %s45
      %s67 = sphi 0, %s69
      %s70 = sphi 0, %s67
      %s71 = sphi 0, %s70
      %s87 = sphi 0, %s71
      %s95 = sphi 0, %s97
      %s98 = sphi 0, %s95
      %s99 = sphi 0, %s98
      %s115 = sphi 0, %s99
      %s125 = sphi 0, %s127
      %s128 = sphi 0, %s125
      %s129 = sphi 0, %s128
      %s145 = sphi 0, %s129
    $region4: #{graph_unpooling.1} parent=1 // loop_header_branch
      %15 = sbr.rel (%p13) target = $region8
    $region5: #{graph_unpooling.1} parent=1 // loop_body
      %s17 = ssub.s32 %s12, 1
      %s18 = ssub.s32 %s12, 2
      %s28 = sadd.s32 1, %s21
      %p29 = scmp.ge.s32.totalorder %s28, 2
      %s30 = scalar_select %p29, 0, %s28
      %s31 = sadd.s32 1, %s20
      %s32 = scalar_select %p29, %s31, %s20
      %p33 = scmp.ge.s32.totalorder %s32, 1
      %s34 = scalar_select %p33, 0, %s32
      %s35 = sadd.s32 1, %s19
      %s36 = scalar_select %p33, %s35, %s19
      %p37 = scmp.ge.s32.totalorder %s36, 2
      %s38 = scalar_select %p37, 0, %s36
      %s39 = ssub.s32 %s21, %s30
      %p40 = scmp.eq.s32.totalorder %s39, 0
      %s42 = sadd.s32 %s41, 1
      %s43 = scalar_select %p40, %s41, %s42
      %p46 = pneg %p40
      %p47 = scmp.eq.s32.totalorder %s12, 3
      %p48 = por %p46, %p47
      %p49 = scmp.ne.s32.totalorder %s41, %s44
      %p50 = scmp.eq.s32.totalorder %s12, 0
      %p51 = por %p49, %p50
      %p52 = scmp.ne.s32.totalorder %s41, %s44
      %p53 = scmp.eq.s32.totalorder %s17, 3
      %p54 = por %p52, %p53
      %p55 = scmp.ne.s32.totalorder %s44, %s45
      %p56 = scmp.eq.s32.totalorder %s17, 0
      %p57 = por %p55, %p56
      %p58 = scmp.ne.s32.totalorder %s44, %s45
      %p59 = scmp.eq.s32.totalorder %s18, 3
      %p60 = por %p58, %p59
      %p62 = scmp.ne.s32.totalorder %s45, %s61
      %p63 = scmp.eq.s32.totalorder %s18, 0
      %p64 = por %p62, %p63
      %s65 = ssub.s32 %s21, %s30
      %p66 = scmp.eq.s32.totalorder %s65, 0
      %s68 = sadd.s32 %s67, 1
      %s69 = scalar_select %p66, %s67, %s68
      %p72 = pneg %p66
      %p73 = scmp.eq.s32.totalorder %s12, 3
      %p74 = por %p72, %p73
      %p75 = scmp.ne.s32.totalorder %s67, %s70
      %p76 = scmp.eq.s32.totalorder %s12, 0
      %p77 = por %p75, %p76
      %p78 = scmp.ne.s32.totalorder %s67, %s70
      %p79 = scmp.eq.s32.totalorder %s17, 3
      %p80 = por %p78, %p79
      %p81 = scmp.ne.s32.totalorder %s70, %s71
      %p82 = scmp.eq.s32.totalorder %s17, 0
      %p83 = por %p81, %p82
      %p84 = scmp.ne.s32.totalorder %s70, %s71
      %p85 = scmp.eq.s32.totalorder %s18, 3
      %p86 = por %p84, %p85
      %p88 = scmp.ne.s32.totalorder %s71, %s87
      %p89 = scmp.eq.s32.totalorder %s18, 0
      %p90 = por %p88, %p89
      %s91 = ssub.s32 %s19, %s38
      %s92 = ssub.s32 %s20, %s34
      %s93 = sor.u32 %s91, %s92
      %p94 = scmp.eq.s32.totalorder %s93, 0
      %s96 = sadd.s32 %s95, 1
      %s97 = scalar_select %p94, %s95, %s96
      %p100 = pneg %p94
      %p101 = scmp.eq.s32.totalorder %s12, 3
      %p102 = por %p100, %p101
      %p103 = scmp.ne.s32.totalorder %s95, %s98
      %p104 = scmp.eq.s32.totalorder %s12, 0
      %p105 = por %p103, %p104
      %p106 = scmp.ne.s32.totalorder %s95, %s98
      %p107 = scmp.eq.s32.totalorder %s17, 3
      %p108 = por %p106, %p107
      %p109 = scmp.ne.s32.totalorder %s98, %s99
      %p110 = scmp.eq.s32.totalorder %s17, 0
      %p111 = por %p109, %p110
      %p112 = scmp.ne.s32.totalorder %s98, %s99
      %p113 = scmp.eq.s32.totalorder %s18, 3
      %p114 = por %p112, %p113
      %p116 = scmp.ne.s32.totalorder %s99, %s115
      %p117 = scmp.eq.s32.totalorder %s18, 0
      %p118 = por %p116, %p117
      %s119 = ssub.s32 %s19, %s38
      %s120 = ssub.s32 %s21, %s30
      %s121 = sor.u32 %s119, %s120
      %s122 = ssub.s32 %s20, %s34
      %s123 = sor.u32 %s121, %s122
      %p124 = scmp.eq.s32.totalorder %s123, 0
      %s126 = sadd.s32 %s125, 1
      %s127 = scalar_select %p124, %s125, %s126
      %p130 = pneg %p124
      %p131 = scmp.eq.s32.totalorder %s12, 3
      %p132 = por %p130, %p131
      %p133 = scmp.ne.s32.totalorder %s125, %s128
      %p134 = scmp.eq.s32.totalorder %s12, 0
      %p135 = por %p133, %p134
      %p136 = scmp.ne.s32.totalorder %s125, %s128
      %p137 = scmp.eq.s32.totalorder %s17, 3
      %p138 = por %p136, %p137
      %p139 = scmp.ne.s32.totalorder %s128, %s129
      %p140 = scmp.eq.s32.totalorder %s17, 0
      %p141 = por %p139, %p140
      %p142 = scmp.ne.s32.totalorder %s128, %s129
      %p143 = scmp.eq.s32.totalorder %s18, 3
      %p144 = por %p142, %p143
      %p146 = scmp.ne.s32.totalorder %s129, %s145
      %p147 = scmp.eq.s32.totalorder %s18, 0
      %p148 = por %p146, %p147
      %p149 = scmp.le.s32.totalorder 1, %s12
      %p150 = scmp.lt.s32.totalorder %s12, 5
      %p151 = pnand %p149, %p150
      %p152 = pneg %p151
      // Predicated region
      $region9: #{graph_unpooling.1} parent=5 // pred_check
        _
      $region10: #{graph_unpooling.1} parent=5 // pred_check_branch
        %154 = sbr.rel (%p151) target = $region12
      $region11: #{graph_unpooling.1} parent=5 // pred_region
        %s155 = ssub.s32 %s12, 1
      $region12: #{graph_unpooling.1} parent=5 // pred_fallthru
        _
      %p156 = scmp.lt.s32.totalorder %s12, 4
      // Predicated region
      $region13: #{graph_unpooling.1} parent=5 // pred_check
        %p157 = pneg %p156
      $region14: #{graph_unpooling.1} parent=5 // pred_check_branch
        %159 = sbr.rel (%p157) target = $region16
      $region15: #{graph_unpooling.1} parent=5 // pred_region
        // Predicated region
        $region17: #{graph_unpooling.1} parent=15 // pred_check
          %p160 = pneg %p51
        $region18: #{graph_unpooling.1} parent=15 // pred_check_branch
          %162 = sbr.rel (%p160) target = $region20
        $region19: #{graph_unpooling.1} parent=15 // pred_region
          %s163 = smul.u32 2, %s21
          %p164 = scmp.lt.s32.totalorder %s163, 3
          %s165 = scalar_select %p164, %s163, 3
          %s166 = smul.addr %s165, 8
          %s167 = scalar_lea.vmem %s0, %s166
          %s168 = smul.u32 2, %s21
        $region20: #{graph_unpooling.1} parent=15 // pred_fallthru
          _
        // Predicated region
        $region21: #{graph_unpooling.1} parent=15 // pred_check
          %p169 = pneg %p77
        $region22: #{graph_unpooling.1} parent=15 // pred_check_branch
          %171 = sbr.rel (%p169) target = $region24
        $region23: #{graph_unpooling.1} parent=15 // pred_region
          %s172 = smul.u32 2, %s21
          %p173 = scmp.lt.s32.totalorder %s172, 3
          %s174 = scalar_select %p173, %s172, 3
          %s175 = smul.addr %s174, 8
          %s176 = scalar_lea.vmem %s1, %s175
          %s177 = smul.u32 2, %s21
        $region24: #{graph_unpooling.1} parent=15 // pred_fallthru
          _
        // Predicated region
        $region25: #{graph_unpooling.1} parent=15 // pred_check
          %p178 = pneg %p105
        $region26: #{graph_unpooling.1} parent=15 // pred_check_branch
          %180 = sbr.rel (%p178) target = $region28
        $region27: #{graph_unpooling.1} parent=15 // pred_region
          %p181 = scmp.lt.s32.totalorder %s19, 1
          %s182 = scalar_select %p181, %s19, 1
          %p183 = scmp.lt.s32.totalorder %s20, 0
          %s184 = scalar_select %p183, %s20, 0
          %s185 = smul.addr %s182, 2
          %s186 = sadd.s32 %s184, %s185
          %s187 = smul.addr %s186, 8
          %s188 = scalar_lea.vmem %s2, %s187
        $region28: #{graph_unpooling.1} parent=15 // pred_fallthru
          _
      $region16: #{graph_unpooling.1} parent=5 // pred_fallthru
        _
      %p189 = scmp.le.s32.totalorder 1, %s12
      %p190 = scmp.lt.s32.totalorder %s12, 5
      %p191 = pnand %p189, %p190
      %p192 = pneg %p191
      // Predicated region
      $region29: #{graph_unpooling.1} parent=5 // pred_check
        _
      $region30: #{graph_unpooling.1} parent=5 // pred_check_branch
        %194 = sbr.rel (%p191) target = $region32
      $region31: #{graph_unpooling.1} parent=5 // pred_region
        %s195 = ssub.s32 %s12, 1
        %s196 = smul.u32 2, %s24
        %p197 = scmp.lt.s32.totalorder %s196, 3
        %s198 = scalar_select %p197, %s196, 3
        %s199 = smul.addr %s198, 8
        %s200 = scalar_lea.vmem %s0, %s199
        %p201 = pneg %p57
        %p202 = pneg %p54
        %s203 = smul.u32 2, %s24
        %p204 = scmp.lt.s32.totalorder %s203, 3
        %s205 = scalar_select %p204, %s203, 3
        %s206 = smul.addr %s205, 8
        %s207 = scalar_lea.vmem %s1, %s206
        %p208 = pneg %p83
        %p209 = pneg %p80
        %p210 = scmp.lt.s32.totalorder %s22, 1
        %s211 = scalar_select %p210, %s22, 1
        %p212 = scmp.lt.s32.totalorder %s23, 0
        %s213 = scalar_select %p212, %s23, 0
        %s214 = smul.addr %s211, 2
        %s215 = sadd.s32 %s213, %s214
        %s216 = smul.addr %s215, 8
        %s217 = scalar_lea.vmem %s2, %s216
        %p218 = pneg %p111
        %p219 = pneg %p108
        %p220 = pneg %p141
        %p221 = pneg %p138
        %s222 = sand.u32 %s128, 1
        %s223 = scalar_lea.sflag [#allocation3], %s222
        %s224 = sand.u32 %s128, 1
        %s225 = smul.addr %s224, 16
        %s226 = scalar_lea.vmem [#allocation2], %s225
        %s227 = smul.u32 2, %s24
        %p228 = scmp.lt.s32.totalorder %s227, 3
        %s229 = scalar_select %p228, %s227, 3
        %s230 = smul.addr %s229, 8
        %s231 = scalar_lea.vmem %s0, %s230
        %s232 = smul.u32 2, %s24
        %s233 = smul.u32 2, %s24
        %p234 = scmp.lt.s32.totalorder %s233, 3
        %s235 = scalar_select %p234, %s233, 3
        %s236 = smul.addr %s235, 8
        %s237 = scalar_lea.vmem %s1, %s236
        %s238 = smul.u32 2, %s24
        %p239 = scmp.lt.s32.totalorder %s22, 1
        %s240 = scalar_select %p239, %s22, 1
        %p241 = scmp.lt.s32.totalorder %s23, 0
        %s242 = scalar_select %p241, %s23, 0
        %s243 = smul.addr %s240, 2
        %s244 = sadd.s32 %s242, %s243
        %s245 = smul.addr %s244, 8
        %s246 = scalar_lea.vmem %s2, %s245
        %s247 = smul.u32 2, %s24
        %s248 = ssub.s32 3, %s247
        %p249 = scmp.lt.s32.totalorder %s248, 2
        %s250 = scalar_select %p249, %s248, 2
        %s251 = smul.u32 8, %s250
        %s252 = smul.u32 %s24, 16
        %s253 = sadd.s32 %s252, 16
        %p254 = scmp.le.s32.totalorder %s253, 16
        // Predicated region
        $region33: #{graph_unpooling.1} parent=31 // pred_check
          %p255 = pneg %p254
        $region34: #{graph_unpooling.1} parent=31 // pred_check_branch
          %257 = sbr.rel (%p255) target = $region36
        $region35: #{graph_unpooling.1} parent=31 // pred_region
          %s258 = scalar_lea.vmem %s246, %s252
          %v259 = vld [vmem:[%s258] sm:$0xff]
          %v260 = vld [vmem:[%s258 + $0x8] sm:$0xff]
          %vm261 = vcmask 261120
          %262 = vst.msk [vmem:[%s226] sm:$0xff] %vm261, %v259
          %263 = vst.msk [vmem:[%s226 + $0x8] sm:$0xff] %vm261, %v260
        $region36: #{graph_unpooling.1} parent=31 // pred_fallthru
          _
        %p264 = scmp.gt.s32.totalorder %s253, 16
        // Predicated region
        $region37: #{graph_unpooling.1} parent=31 // pred_check
          %p265 = pneg %p264
        $region38: #{graph_unpooling.1} parent=31 // pred_check_branch
          %267 = sbr.rel (%p265) target = $region40
        $region39: #{graph_unpooling.1} parent=31 // pred_region
          %v268 = vld [vmem:[%s246] sm:$0xff]
          %v269 = vld [vmem:[%s246 + $0x8] sm:$0xff]
          %v270 = vld [vmem:[%s231] sm:$0xff]
          %v271 = vld [vmem:[%s231 + $0x8] sm:$0xff]
          %v272 = vld [vmem:[%s237] sm:$0xff]
          %v273 = vld [vmem:[%s237 + $0x8] sm:$0xff]
          %v274 = vlaneseq
          %v275 = vand.u32 %v274, 127
          %276 = vset.pattern.permute.xlu0 0
          %277 = vperm.xlu0 %276, %v270
          %v278 = vpop.permute.xlu0 %277
          %279 = vset.pattern.permute.xlu0 0
          %280 = vperm.xlu0 %279, %v271
          %v281 = vpop.permute.xlu0 %280
          %vm282 = vcmp.eq.s32.totalorder %v275, %v278
          %vm283 = vcmp.eq.s32.totalorder %v275, %v281
          %v284 = vsel %vm282, 1, 0
          %v285 = vsel %vm283, 1, 0
          %v286 = vcvt.s32.f32 %v284
          %v287 = vcvt.s32.f32 %v285
          %288 = vset.pattern.permute.xlu0 0
          %289 = vperm.xlu0 %288, %v272
          %v290 = vpop.permute.xlu0 %289
          %291 = vset.pattern.permute.xlu0 0
          %292 = vperm.xlu0 %291, %v273
          %v293 = vpop.permute.xlu0 %292
          %vm294 = vcmp.eq.s32.totalorder %v275, %v290
          %vm295 = vcmp.eq.s32.totalorder %v275, %v293
          %v296 = vsel %vm294, 1, 0
          %v297 = vsel %vm295, 1, 0
          %v298 = vcvt.s32.f32 %v296
          %v299 = vcvt.s32.f32 %v297
          %v300 = vadd.f32 %v286, %v298
          %v301 = vadd.f32 %v287, %v299
          %v302 = vmul.f32 %v300, 0.5
          %v303 = vmul.f32 %v301, 0.5
          %vm304 = vcmask 130048
          %v306 = vsel %vm304, %v302, 0
          %v309 = vsel %vm304, %v303, 0
          %311 = vmatpush.msra.mxu0 0.0
          %312 = vmatpush.msra.mxu0 0.0
          %313 = vmatpush.msra.mxu0 0.0
          %314 = vmatpush.msra.mxu0 0.0
          %315 = vmatpush.msra.mxu0 0.0
          %316 = vmatpush.msra.mxu0 0.0
          %317 = vmatpush.msra.mxu0 0.0
          %318 = vmatpush.msra.mxu0 0.0
          %319 = vmatpush.msra.mxu0 0.0
          %320 = vmatpush.msra.mxu0 0.0
          %321 = vmatpush.msra.mxu0 0.0
          %322 = vmatpush.msra.mxu0 0.0
          %323 = vmatpush.msra.mxu0 0.0
          %324 = vmatpush.msra.mxu0 0.0
          %v325 = vand.u32 %v269, 4294901760
          %326 = vmatpush.msra.mxu0 %v325
          %v327 = vand.u32 %v268, 4294901760
          %328 = vmatpush.msra.mxu0 %v327
          %v329 = vand.u32 %v306, 4294901760
          %v330 = vsub.f32 %v306, %v329
          %v331 = vand.u32 %v330, 4294901760
          %v332 = vsub.f32 %v330, %v331
          %v333 = vand.u32 %v332, 4294901760
          %334 = vmatmul.f32.gmra.mxu0 %v333
          %v335 = vpop.f32.mrf.mxu0
          %v336 = vadd.f32 0.0, %v335
          %v337 = vand.u32 %v309, 4294901760
          %v338 = vsub.f32 %v309, %v337
          %v339 = vand.u32 %v338, 4294901760
          %v340 = vsub.f32 %v338, %v339
          %v341 = vand.u32 %v340, 4294901760
          %342 = vmatmul.f32.gmra.mxu0 %v341
          %v343 = vpop.f32.mrf.mxu0
          %v344 = vadd.f32 0.0, %v343
          %345 = vdwg.mxu0
          %346 = vmatpush.msra.mxu0 0.0
          %347 = vmatpush.msra.mxu0 0.0
          %348 = vmatpush.msra.mxu0 0.0
          %349 = vmatpush.msra.mxu0 0.0
          %350 = vmatpush.msra.mxu0 0.0
          %351 = vmatpush.msra.mxu0 0.0
          %352 = vmatpush.msra.mxu0 0.0
          %353 = vmatpush.msra.mxu0 0.0
          %354 = vmatpush.msra.mxu0 0.0
          %355 = vmatpush.msra.mxu0 0.0
          %356 = vmatpush.msra.mxu0 0.0
          %357 = vmatpush.msra.mxu0 0.0
          %358 = vmatpush.msra.mxu0 0.0
          %359 = vmatpush.msra.mxu0 0.0
          %v360 = vand.u32 %v269, 4294901760
          %v361 = vsub.f32 %v269, %v360
          %v362 = vand.u32 %v361, 4294901760
          %v363 = vsub.f32 %v361, %v362
          %v364 = vand.u32 %v363, 4294901760
          %365 = vmatpush.msra.mxu0 %v364
          %v366 = vand.u32 %v268, 4294901760
          %v367 = vsub.f32 %v268, %v366
          %v368 = vand.u32 %v367, 4294901760
          %v369 = vsub.f32 %v367, %v368
          %v370 = vand.u32 %v369, 4294901760
          %371 = vmatpush.msra.mxu0 %v370
          %v372 = vand.u32 %v306, 4294901760
          %373 = vmatmul.f32.gmra.mxu0 %v372
          %v374 = vpop.f32.mrf.mxu0
          %v375 = vadd.f32 %v336, %v374
          %v376 = vand.u32 %v309, 4294901760
          %377 = vmatmul.f32.gmra.mxu0 %v376
          %v378 = vpop.f32.mrf.mxu0
          %v379 = vadd.f32 %v344, %v378
          %380 = vdwg.mxu0
          %381 = vmatpush.msra.mxu0 0.0
          %382 = vmatpush.msra.mxu0 0.0
          %383 = vmatpush.msra.mxu0 0.0
          %384 = vmatpush.msra.mxu0 0.0
          %385 = vmatpush.msra.mxu0 0.0
          %386 = vmatpush.msra.mxu0 0.0
          %387 = vmatpush.msra.mxu0 0.0
          %388 = vmatpush.msra.mxu0 0.0
          %389 = vmatpush.msra.mxu0 0.0
          %390 = vmatpush.msra.mxu0 0.0
          %391 = vmatpush.msra.mxu0 0.0
          %392 = vmatpush.msra.mxu0 0.0
          %393 = vmatpush.msra.mxu0 0.0
          %394 = vmatpush.msra.mxu0 0.0
          %v395 = vand.u32 %v269, 4294901760
          %v396 = vsub.f32 %v269, %v395
          %397 = vmatpush.msra.mxu0 %v396
          %v398 = vand.u32 %v268, 4294901760
          %v399 = vsub.f32 %v268, %v398
          %400 = vmatpush.msra.mxu0 %v399
          %v401 = vand.u32 %v306, 4294901760
          %v402 = vsub.f32 %v306, %v401
          %403 = vmatmul.f32.gmra.mxu0 %v402
          %v404 = vpop.f32.mrf.mxu0
          %v405 = vadd.f32 %v375, %v404
          %v406 = vand.u32 %v309, 4294901760
          %v407 = vsub.f32 %v309, %v406
          %408 = vmatmul.f32.gmra.mxu0 %v407
          %v409 = vpop.f32.mrf.mxu0
          %v410 = vadd.f32 %v379, %v409
          %411 = vdwg.mxu0
          %412 = vmatpush.msra.mxu0 0.0
          %413 = vmatpush.msra.mxu0 0.0
          %414 = vmatpush.msra.mxu0 0.0
          %415 = vmatpush.msra.mxu0 0.0
          %416 = vmatpush.msra.mxu0 0.0
          %417 = vmatpush.msra.mxu0 0.0
          %418 = vmatpush.msra.mxu0 0.0
          %419 = vmatpush.msra.mxu0 0.0
          %420 = vmatpush.msra.mxu0 0.0
          %421 = vmatpush.msra.mxu0 0.0
          %422 = vmatpush.msra.mxu0 0.0
          %423 = vmatpush.msra.mxu0 0.0
          %424 = vmatpush.msra.mxu0 0.0
          %425 = vmatpush.msra.mxu0 0.0
          %v426 = vand.u32 %v269, 4294901760
          %427 = vmatpush.msra.mxu0 %v426
          %v428 = vand.u32 %v268, 4294901760
          %429 = vmatpush.msra.mxu0 %v428
          %v430 = vand.u32 %v306, 4294901760
          %v431 = vsub.f32 %v306, %v430
          %v432 = vand.u32 %v431, 4294901760
          %433 = vmatmul.f32.gmra.mxu0 %v432
          %v434 = vpop.f32.mrf.mxu0
          %v435 = vadd.f32 %v405, %v434
          %v436 = vand.u32 %v309, 4294901760
          %v437 = vsub.f32 %v309, %v436
          %v438 = vand.u32 %v437, 4294901760
          %439 = vmatmul.f32.gmra.mxu0 %v438
          %v440 = vpop.f32.mrf.mxu0
          %v441 = vadd.f32 %v410, %v440
          %442 = vdwg.mxu0
          %443 = vmatpush.msra.mxu0 0.0
          %444 = vmatpush.msra.mxu0 0.0
          %445 = vmatpush.msra.mxu0 0.0
          %446 = vmatpush.msra.mxu0 0.0
          %447 = vmatpush.msra.mxu0 0.0
          %448 = vmatpush.msra.mxu0 0.0
          %449 = vmatpush.msra.mxu0 0.0
          %450 = vmatpush.msra.mxu0 0.0
          %451 = vmatpush.msra.mxu0 0.0
          %452 = vmatpush.msra.mxu0 0.0
          %453 = vmatpush.msra.mxu0 0.0
          %454 = vmatpush.msra.mxu0 0.0
          %455 = vmatpush.msra.mxu0 0.0
          %456 = vmatpush.msra.mxu0 0.0
          %v457 = vand.u32 %v269, 4294901760
          %v458 = vsub.f32 %v269, %v457
          %v459 = vand.u32 %v458, 4294901760
          %460 = vmatpush.msra.mxu0 %v459
          %v461 = vand.u32 %v268, 4294901760
          %v462 = vsub.f32 %v268, %v461
          %v463 = vand.u32 %v462, 4294901760
          %464 = vmatpush.msra.mxu0 %v463
          %v465 = vand.u32 %v306, 4294901760
          %466 = vmatmul.f32.gmra.mxu0 %v465
          %v467 = vpop.f32.mrf.mxu0
          %v468 = vadd.f32 %v435, %v467
          %v469 = vand.u32 %v309, 4294901760
          %470 = vmatmul.f32.gmra.mxu0 %v469
          %v471 = vpop.f32.mrf.mxu0
          %v472 = vadd.f32 %v441, %v471
          %473 = vdwg.mxu0
          %474 = vmatpush.msra.mxu0 0.0
          %475 = vmatpush.msra.mxu0 0.0
          %476 = vmatpush.msra.mxu0 0.0
          %477 = vmatpush.msra.mxu0 0.0
          %478 = vmatpush.msra.mxu0 0.0
          %479 = vmatpush.msra.mxu0 0.0
          %480 = vmatpush.msra.mxu0 0.0
          %481 = vmatpush.msra.mxu0 0.0
          %482 = vmatpush.msra.mxu0 0.0
          %483 = vmatpush.msra.mxu0 0.0
          %484 = vmatpush.msra.mxu0 0.0
          %485 = vmatpush.msra.mxu0 0.0
          %486 = vmatpush.msra.mxu0 0.0
          %487 = vmatpush.msra.mxu0 0.0
          %v488 = vand.u32 %v269, 4294901760
          %489 = vmatpush.msra.mxu0 %v488
          %v490 = vand.u32 %v268, 4294901760
          %491 = vmatpush.msra.mxu0 %v490
          %v492 = vand.u32 %v306, 4294901760
          %493 = vmatmul.f32.gmra.mxu0 %v492
          %v494 = vpop.f32.mrf.mxu0
          %v495 = vadd.f32 %v468, %v494
          %v496 = vand.u32 %v309, 4294901760
          %497 = vmatmul.f32.gmra.mxu0 %v496
          %v498 = vpop.f32.mrf.mxu0
          %v499 = vadd.f32 %v472, %v498
          %500 = vdwg.mxu0
          %vm501 = vcmask 261120
          %502 = vst.msk [vmem:[%s226] sm:$0xff] %vm501, %v495
          %503 = vst.msk [vmem:[%s226 + $0x8] sm:$0xff] %vm501, %v499
        $region40: #{graph_unpooling.1} parent=31 // pred_fallthru
          _
        %s504 = sand.u32 %s128, 1
        %s505 = scalar_lea.sflag [#allocation3], %s504
        %s506 = sand.u32 %s128, 1
        %s507 = smul.addr %s506, 16
        %s508 = scalar_lea.vmem [#allocation2], %s507
        // Predicated region
        $region41: #{graph_unpooling.1} parent=31 // pred_check
          %p509 = pneg %p138
        $region42: #{graph_unpooling.1} parent=31 // pred_check_branch
          %511 = sbr.rel (%p509) target = $region44
        $region43: #{graph_unpooling.1} parent=31 // pred_region
          %s512 = smul.u32 2, %s24
          %s513 = ssub.s32 3, %s512
          %p514 = scmp.lt.s32.totalorder %s513, 2
          %s515 = scalar_select %p514, %s513, 2
          %s516 = smul.u32 8, %s515
          %s517 = ssub.s32 16, %s516
          %s518 = sshll.u32 %s517, 4
          %519 = vsyncadd %s505, %s518
          %p520 = scmp.ne.s32.totalorder 0, %s516
          %s521 = sadd.s32 %s23, %s512
          %s522 = smul.addr %s22, 3
          %s523 = sadd.s32 %s521, %s522
          %s524 = smul.addr %s523, 8
          %s525 = scalar_lea.hbm %s3, %s524
          %s526 = smul.u32 8, %s515
          %s527 = sshll.u32 %s508, 4
          %s528 = int_to_ptr.vmem [resolvable:$true] %s527
          %s529 = sshll.u32 %s525, 4
          %s530 = int_to_ptr.hbm [resolvable:$true] %s529
          %s531 = sshll.u32 %s526, 4
          %535 = dma.vmem_to_hbm [thread:$0]  (%p520), %s528, %s531, %s530, %s505, 128, 128, 8
        $region44: #{graph_unpooling.1} parent=31 // pred_fallthru
          _
      $region32: #{graph_unpooling.1} parent=5 // pred_fallthru
        _
      %p536 = scmp.le.s32.totalorder 2, %s12
      // Predicated region
      $region45: #{graph_unpooling.1} parent=5 // pred_check
        %p537 = pneg %p536
      $region46: #{graph_unpooling.1} parent=5 // pred_check_branch
        %539 = sbr.rel (%p537) target = $region48
      $region47: #{graph_unpooling.1} parent=5 // pred_region
        %s540 = ssub.s32 %s12, 2
        // Predicated region
        $region49: #{graph_unpooling.1} parent=47 // pred_check
          %p541 = pneg %p144
        $region50: #{graph_unpooling.1} parent=47 // pred_check_branch
          %543 = sbr.rel (%p541) target = $region52
        $region51: #{graph_unpooling.1} parent=47 // pred_region
          %s544 = sand.u32 %s129, 1
          %s545 = scalar_lea.sflag [#allocation3], %s544
          %s546 = sand.u32 %s129, 1
          %s547 = smul.addr %s546, 16
          %s548 = scalar_lea.vmem [#allocation2], %s547
          %550 = dma.done %s545, 256
        $region52: #{graph_unpooling.1} parent=47 // pred_fallthru
          _
      $region48: #{graph_unpooling.1} parent=5 // pred_fallthru
        _
    $region6: #{graph_unpooling.1} parent=1 // loop_footer
      %s16 = sadd.s32 1, %s12
    $region7: #{graph_unpooling.1} parent=1 // loop_footer_branch
      %11 = sbr.rel target = $region3
    $region8: #{graph_unpooling.1} parent=1 // loop_exit
      _
    %551 = vsyncpa [#allocation3], 1
    %s552 = scalar_lea.sflag [#allocation3], 1
    %553 = vsyncpa %s552, 1

</llo_original>
